<compile_context>
chip_gen: v6e
topology: v6e:2x2x1
jax: 0.10.0
libtpu: 0.0.40
codegen_flags: <defaults>
</compile_context>

<pallas_src>
import functools

import jax
import jax.numpy as jnp
from jax.experimental import pallas as pl
from jax.experimental.pallas import tpu as pltpu


def _round_up(x, m):
    return ((x + m - 1) // m) * m


def _t2v_cos_kernel(tau_ref, w_ref, b_ref, out_ref):
    tm, in_f = tau_ref.shape
    out_f = out_ref.shape[-1]

    tau = tau_ref[...].astype(jnp.float32)
    w = w_ref[...].astype(jnp.float32)
    bias = jnp.broadcast_to(b_ref[...].astype(jnp.float32), (tm, out_f))

    if in_f <= 16:
        # Degenerate-K matmul: skip the MXU, use VPU broadcast multiply-adds.
        acc = bias
        for k in range(in_f):  # static unroll (in_f is a trace-time constant)
            acc = acc + tau[:, k:k + 1] * w[k:k + 1, :]
    else:
        acc = jnp.dot(tau, w, preferred_element_type=jnp.float32) + bias

    # cos on columns [0, out_f-2]; identity (linear w0/b0 term) on the last.
    col = jax.lax.broadcasted_iota(jnp.int32, acc.shape, dimension=1)
    out_ref[...] = jnp.where(col < out_f - 1, jnp.cos(acc), acc).astype(out_ref.dtype)


@functools.partial(jax.jit, static_argnames=("block_rows",))
def cosine_activation(tau, w, b, w0, b0, *, block_rows=2048):
    """Pallas implementation of CosineActivation.forward.

    tau: [B, in_features] f32
    w:   [in_features, out_features-1] f32
    b:   [out_features-1] f32
    w0:  [in_features, 1] f32
    b0:  [1] f32
    returns: [B, out_features] f32
    """
    B, in_features = tau.shape
    out_features = w.shape[1] + 1

    # Fuse weights/biases so the kernel does a single accumulation.
    # (In a real module these would be precomputed once at init time.)
    w_full = jnp.concatenate([w, w0], axis=1)                           # [in, out]
    b_full = jnp.concatenate([b, b0], axis=0).reshape(1, out_features)  # [1, out]

    # Batch tile: as large as requested, but no larger than the (8-aligned)
    # batch size. Partial trailing blocks are handled by Pallas masking.
    tm = min(_round_up(block_rows, 8), _round_up(B, 8))
    grid = (pl.cdiv(B, tm),)

    return pl.pallas_call(
        _t2v_cos_kernel,
        out_shape=jax.ShapeDtypeStruct((B, out_features), jnp.float32),
        grid_spec=pltpu.PrefetchScalarGridSpec(
            num_scalar_prefetch=0,
            grid=grid,
            in_specs=[
                pl.BlockSpec((tm, in_features), lambda i: (i, 0)),
                # Weights/biases: constant index_map -> VMEM-resident, no re-DMA.
                pl.BlockSpec((in_features, out_features), lambda i: (0, 0)),
                pl.BlockSpec((1, out_features), lambda i: (0, 0)),
            ],
            out_specs=pl.BlockSpec((tm, out_features), lambda i: (i, 0)),
        ),
        compiler_params=pltpu.CompilerParams(
            dimension_semantics=("parallel",)),
    )(tau, w_full, b_full)


def _reference(tau, w, b, w0, b0):
    v1 = jnp.cos(tau @ w + b)
    v2 = tau @ w0 + b0
    return jnp.concatenate([v1, v2], axis=1)


if __name__ == "__main__":
    in_features, out_features = 4, 32

    key = jax.random.PRNGKey(0)
    k_tau, k_w0, k_b0, k_w, k_b, k_tau2 = jax.random.split(key, 6)

    w0 = jax.random.normal(k_w0, (in_features, 1), dtype=jnp.float32)
    b0 = jax.random.normal(k_b0, (1,), dtype=jnp.float32)
    w = jax.random.normal(k_w, (in_features, out_features - 1), dtype=jnp.float32)
    b = jax.random.normal(k_b, (out_features - 1,), dtype=jnp.float32)

    # Small-shape check (single tile).
    batch = 8
    tau = jax.random.normal(k_tau, (batch, in_features), dtype=jnp.float32)
    out = jax.block_until_ready(cosine_activation(tau, w, b, w0, b0))
    ref = _reference(tau, w, b, w0, b0)
    assert out.shape == (batch, out_features)
    assert jnp.allclose(out, ref, atol=1e-5, rtol=1e-5)

    # Multi-tile check with a ragged trailing block (exercises the pipeline).
    batch2 = 300
    tau2 = jax.random.normal(k_tau2, (batch2, in_features), dtype=jnp.float32)
    out2 = jax.block_until_ready(
        cosine_activation(tau2, w, b, w0, b0, block_rows=128))
    ref2 = _reference(tau2, w, b, w0, b0)
    assert out2.shape == (batch2, out_features)
    assert jnp.allclose(out2, ref2, atol=1e-5, rtol=1e-5)

    print("KERNEL_OK")
</pallas_src>

<mosaic_0001>
module attributes {stable_mosaic.version = 11 : i64} {
  func.func @_t2v_cos_kernel(%arg0: i32, %arg1: memref<8x4xf32, #tpu.memory_space<vmem>>, %arg2: memref<4x32xf32, #tpu.memory_space<vmem>>, %arg3: memref<1x32xf32, #tpu.memory_space<vmem>>, %arg4: memref<8x32xf32, #tpu.memory_space<vmem>>) attributes {dimension_semantics = [#tpu.dimension_semantics<parallel>], iteration_bounds = array<i64: 1>, scalar_prefetch = 0 : i64, scratch_operands = 0 : i64, tpu.core_type = #tpu.core_type<tc>, window_params = [{transform_indices = @transform_0, window_bounds = array<i64: 8, 4>}, {pipeline_mode = #tpu.pipeline_mode<synchronous>, transform_indices = @transform_1, window_bounds = array<i64: 4, 32>}, {pipeline_mode = #tpu.pipeline_mode<synchronous>, transform_indices = @transform_2, window_bounds = array<i64: 1, 32>}, {transform_indices = @transform_3, window_bounds = array<i64: 8, 32>}]} {
    %c0 = arith.constant 0 : index
    %c0_0 = arith.constant 0 : index
    %0 = vector.load %arg1[%c0, %c0_0] : memref<8x4xf32, #tpu.memory_space<vmem>>, vector<8x4xf32>
    %c0_1 = arith.constant 0 : index
    %c0_2 = arith.constant 0 : index
    %1 = vector.load %arg2[%c0_1, %c0_2] : memref<4x32xf32, #tpu.memory_space<vmem>>, vector<4x32xf32>
    %c0_3 = arith.constant 0 : index
    %c0_4 = arith.constant 0 : index
    %2 = vector.load %arg3[%c0_3, %c0_4] : memref<1x32xf32, #tpu.memory_space<vmem>>, vector<1x32xf32>
    %3 = vector.shape_cast %2 : vector<1x32xf32> to vector<1x32xf32>
    %4 = vector.broadcast %3 : vector<1x32xf32> to vector<8x32xf32>
    %5 = vector.extract_strided_slice %0 {offsets = [0, 0], sizes = [8, 1], strides = [1, 1]} : vector<8x4xf32> to vector<8x1xf32>
    %6 = vector.extract_strided_slice %1 {offsets = [0, 0], sizes = [1, 32], strides = [1, 1]} : vector<4x32xf32> to vector<1x32xf32>
    %7 = vector.broadcast %5 : vector<8x1xf32> to vector<8x32xf32>
    %8 = vector.broadcast %6 : vector<1x32xf32> to vector<8x32xf32>
    %9 = arith.mulf %7, %8 : vector<8x32xf32>
    %10 = arith.addf %4, %9 : vector<8x32xf32>
    %11 = vector.extract_strided_slice %0 {offsets = [0, 1], sizes = [8, 1], strides = [1, 1]} : vector<8x4xf32> to vector<8x1xf32>
    %12 = vector.extract_strided_slice %1 {offsets = [1, 0], sizes = [1, 32], strides = [1, 1]} : vector<4x32xf32> to vector<1x32xf32>
    %13 = vector.broadcast %11 : vector<8x1xf32> to vector<8x32xf32>
    %14 = vector.broadcast %12 : vector<1x32xf32> to vector<8x32xf32>
    %15 = arith.mulf %13, %14 : vector<8x32xf32>
    %16 = arith.addf %10, %15 : vector<8x32xf32>
    %17 = vector.extract_strided_slice %0 {offsets = [0, 2], sizes = [8, 1], strides = [1, 1]} : vector<8x4xf32> to vector<8x1xf32>
    %18 = vector.extract_strided_slice %1 {offsets = [2, 0], sizes = [1, 32], strides = [1, 1]} : vector<4x32xf32> to vector<1x32xf32>
    %19 = vector.broadcast %17 : vector<8x1xf32> to vector<8x32xf32>
    %20 = vector.broadcast %18 : vector<1x32xf32> to vector<8x32xf32>
    %21 = arith.mulf %19, %20 : vector<8x32xf32>
    %22 = arith.addf %16, %21 : vector<8x32xf32>
    %23 = vector.extract_strided_slice %0 {offsets = [0, 3], sizes = [8, 1], strides = [1, 1]} : vector<8x4xf32> to vector<8x1xf32>
    %24 = vector.extract_strided_slice %1 {offsets = [3, 0], sizes = [1, 32], strides = [1, 1]} : vector<4x32xf32> to vector<1x32xf32>
    %25 = vector.broadcast %23 : vector<8x1xf32> to vector<8x32xf32>
    %26 = vector.broadcast %24 : vector<1x32xf32> to vector<8x32xf32>
    %27 = arith.mulf %25, %26 : vector<8x32xf32>
    %28 = arith.addf %22, %27 : vector<8x32xf32>
    %29 = tpu.iota {dimensions = array<i32: 1>} : vector<8x32xi32>
    %c31_i32 = arith.constant 31 : i32
    %30 = vector.broadcast %c31_i32 : i32 to vector<8x32xi32>
    %31 = arith.cmpi slt, %29, %30 : vector<8x32xi32>
    %32 = math.cos %28 : vector<8x32xf32>
    %33 = arith.select %31, %32, %28 : vector<8x32xi1>, vector<8x32xf32>
    %c0_5 = arith.constant 0 : index
    %c0_6 = arith.constant 0 : index
    %34 = vector.load %arg4[%c0_5, %c0_6] : memref<8x32xf32, #tpu.memory_space<vmem>>, vector<8x32xf32>
    tpu.vector_store %arg4[%c0_5, %c0_6], %33 {strides = array<i32>} : memref<8x32xf32, #tpu.memory_space<vmem>>, vector<8x32xf32>,
    return
  }
  func.func @transform_0(%arg0: i32) -> (i32, i32) {
    %c0_i32 = arith.constant 0 : i32
    %c0_i32_0 = arith.constant 0 : i32
    return %arg0, %c0_i32 : i32, i32
  }
  func.func @transform_1(%arg0: i32) -> (i32, i32) {
    %c0_i32 = arith.constant 0 : i32
    %c0_i32_0 = arith.constant 0 : i32
    %c0_i32_1 = arith.constant 0 : i32
    return %c0_i32, %c0_i32_0 : i32, i32
  }
  func.func @transform_2(%arg0: i32) -> (i32, i32) {
    %c0_i32 = arith.constant 0 : i32
    %c0_i32_0 = arith.constant 0 : i32
    %c0_i32_1 = arith.constant 0 : i32
    return %c0_i32, %c0_i32_0 : i32, i32
  }
  func.func @transform_3(%arg0: i32) -> (i32, i32) {
    %c0_i32 = arith.constant 0 : i32
    %c0_i32_0 = arith.constant 0 : i32
    return %arg0, %c0_i32 : i32, i32
  }
}

</mosaic_0001>

<llo_original>
// kernel: cosine_activation.1
$region0: #{cosine_activation.1}
  #allocation0 [shape = 'u32[]', space=smem, size = 0x4, offset = 0x4, fixed_abs, tag = 'smem constant byte address 0x4 - core index']
  #allocation1 [shape = 'u32[144,128]{1,0:T(1,128)}', space=vmem, size = 0x12000, scoped, tag = 'internal scratch']
  %s0 = inlined_call_operand.vmem [shape: f32[8,4], index: 0, kind: input, shape index: {}]
  %s1 = inlined_call_operand.vmem [shape: f32[4,32], index: 1, kind: input, shape index: {}]
  %s2 = inlined_call_operand.vmem [shape: f32[1,32], index: 2, kind: input, shape index: {}]
  %s3 = inlined_call_operand.hbm [shape: f32[8,32], index: 3, kind: output, shape index: {}]
  %s4 = sld [smem:[#allocation0]]
  $region22: #{cosine_activation.1} parent=0
    _
  %s6 = ssub.s32 1, %s4
  %s7 = scalar_select 0, %s6, %s4
  $region1: #{cosine_activation.1} parent=0
    #allocation2 [shape = 'u8[4096]{0}', space=vmem, size = 0x1000, scoped, tag = 'output window, operand 0, single buffered']
    #allocation3 [shape = 's32[1]{0}', space=sflag, size = 0x4, scoped, tag = 'scoped memory for cosine_activation.1']
    %8 = vsyncpa [#allocation3], 0
    // Predicated region
    $region2: #{cosine_activation.1} parent=1 // pred_check
      _
    $region3: #{cosine_activation.1} parent=1 // pred_check_branch
      %10 = sbr.rel (0) target = $region5
    $region4: #{cosine_activation.1} parent=1 // pred_region
      _
    $region5: #{cosine_activation.1} parent=1 // pred_fallthru
      _
    // Predicated region
    $region6: #{cosine_activation.1} parent=1 // pred_check
      _
    $region7: #{cosine_activation.1} parent=1 // pred_check_branch
      %12 = sbr.rel (0) target = $region9
    $region8: #{cosine_activation.1} parent=1 // pred_region
      _
    $region9: #{cosine_activation.1} parent=1 // pred_fallthru
      _
    // Predicated region
    $region10: #{cosine_activation.1} parent=1 // pred_check
      _
    $region11: #{cosine_activation.1} parent=1 // pred_check_branch
      %14 = sbr.rel (0) target = $region13
    $region12: #{cosine_activation.1} parent=1 // pred_region
      _
    $region13: #{cosine_activation.1} parent=1 // pred_fallthru
      _
    %v15 = vld [vmem:[%s0] sm:$0xff]
    %v16 = vld [vmem:[%s1] sm:$0xf]
    %v17 = vld [vmem:[%s2] sm:$0x1]
    %v19 = vlaneseq
    %v20 = vshrl.u32 %v19, 7
    %v21 = vsub.s32 0, %v20
    %v22 = vrot.slane %v17, %v21
    %25 = vset.pattern.permute.xlu0 0
    %26 = vperm.xlu0 %25, %v15
    %v27 = vpop.permute.xlu0 %26
    %v29 = vlaneseq
    %v30 = vshrl.u32 %v29, 7
    %v31 = vsub.s32 0, %v30
    %v32 = vrot.slane %v16, %v31
    %v33 = vmul.f32 %v27, %v32
    %v34 = vadd.f32 %v22, %v33
    %35 = vset.pattern.permute.xlu0 1
    %36 = vperm.xlu0 %35, %v15
    %v37 = vpop.permute.xlu0 %36
    %v39 = vlaneseq
    %v40 = vshrl.u32 %v39, 7
    %v41 = vsub.s32 1, %v40
    %v42 = vrot.slane %v16, %v41
    %v43 = vmul.f32 %v37, %v42
    %v44 = vadd.f32 %v34, %v43
    %45 = vset.pattern.permute.xlu0 2
    %46 = vperm.xlu0 %45, %v15
    %v47 = vpop.permute.xlu0 %46
    %v49 = vlaneseq
    %v50 = vshrl.u32 %v49, 7
    %v51 = vsub.s32 2, %v50
    %v52 = vrot.slane %v16, %v51
    %v53 = vmul.f32 %v47, %v52
    %v54 = vadd.f32 %v44, %v53
    %55 = vset.pattern.permute.xlu0 3
    %56 = vperm.xlu0 %55, %v15
    %v57 = vpop.permute.xlu0 %56
    %v59 = vlaneseq
    %v60 = vshrl.u32 %v59, 7
    %v61 = vsub.s32 3, %v60
    %v62 = vrot.slane %v16, %v61
    %v63 = vmul.f32 %v57, %v62
    %v64 = vadd.f32 %v54, %v63
    %v65 = vlaneseq
    %v66 = vand.u32 %v65, 127
    %vm67 = vcmp.lt.s32.totalorder %v66, 31
    %v68 = vand.u32 2147483647, %v64
    %vm69 = vcmp.le.f32.partialorder %v68, 0.7853982
    %vm70 = vcmp.lt.s32.totalorder %v64, 0
    %v71 = vand.u32 %v64, 2139095040
    %v72 = vshrl.u32 %v71, 23
    %v73 = vsub.s32 %v72, 127
    %v74 = vand.u32 2147483647, %v64
    %v75 = vand.u32 %v74, 8388607
    %v76 = vor.u32 %v75, 8388608
    %v77 = vsub.s32 0, %v76
    %v78 = vadd.s32 %v73, 1
    %vm79 = vcmp.gt.s32.totalorder %v78, 0
    %v80 = vsel %vm79, %v78, 0
    %v81 = vshrl.u32 %v80, 5
    %v82 = vand.u32 %v80, 31
    %v83 = vsub.s32 32, %v82
    %v84 = vshrl.u32 683565275, %v83
    %v85 = vshll.u32 683565275, %v82
    %v86 = vshrl.u32 2475754826, %v83
    %v87 = vor.u32 %v85, %v86
    %v88 = vshll.u32 2475754826, %v82
    %v89 = vshrl.u32 2131351028, %v83
    %v90 = vor.u32 %v88, %v89
    %v91 = vshll.u32 2131351028, %v82
    %v92 = vshrl.u32 2102212464, %v83
    %v93 = vor.u32 %v91, %v92
    %v94 = vshll.u32 2102212464, %v82
    %v95 = vshrl.u32 920167782, %v83
    %v96 = vor.u32 %v94, %v95
    %v97 = vshll.u32 920167782, %v82
    %v98 = vshrl.u32 1326507024, %v83
    %v99 = vor.u32 %v97, %v98
    %vm100 = vcmp.lt.s32.totalorder %v81, 1
    %vm101 = vcmp.lt.s32.totalorder %v81, 2
    %vm102 = vcmp.lt.s32.totalorder %v81, 3
    %vm103 = vcmp.lt.s32.totalorder %v81, 4
    %v104 = vsel %vm100, %v84, %v87
    %v105 = vsel %vm103, %v93, 2102212464
    %v106 = vsel %vm102, %v90, %v105
    %v107 = vsel %vm101, %v104, %v106
    %v108 = vsel %vm100, %v87, %v90
    %v109 = vsel %vm103, %v96, 920167782
    %v110 = vsel %vm102, %v93, %v109
    %v111 = vsel %vm101, %v108, %v110
    %v112 = vsel %vm100, %v90, %v93
    %v113 = vsel %vm103, %v99, 1326507024
    %v114 = vsel %vm102, %v96, %v113
    %v115 = vsel %vm101, %v112, %v114
    %v116 = vshll.u32 %v76, 8
    %v117 = vmul.u32.u64.compose %v116, %v115
    %v118 = vextract.low.u32 %v117
    %v119 = vextract.high.u32 %v117
    %v120 = vmul.u32.u64.compose %v116, %v111
    %v121 = vextract.low.u32 %v120
    %v122 = vextract.high.u32 %v120
    %v123 = vmul.u32 %v116, %v107
    %v124 = vadd.s32 %v119, %v121
    %vm125 = vc.u32 %v119, %v121
    %v126 = vadd.s32 %v122, 1
    %v127 = vsel %vm125, %v126, %v122
    %v128 = vadd.s32 %v123, %v127
    %v129 = vadd.s32 %v128, 536870912
    %v130 = vshrl.u32 %v129, 30
    %v131 = vshll.u32 %v130, 30
    %v132 = vsub.s32 %v128, %v131
    %vm133 = vcmp.lt.s32.totalorder %v132, 0
    %v134 = vsub.s32 0, %v132
    %v135 = vsel %vm133, %v134, %v132
    %v136 = vclz %v135
    %v137 = vsub.s32 %v136, 2
    %vm138 = vcmp.gt.s32.totalorder 0, %v137
    %v139 = vsel %vm138, 0, %v137
    %v140 = vsub.s32 32, %v139
    %v141 = vshll.u32 %v132, %v139
    %v142 = vshrl.u32 %v124, %v140
    %v143 = vor.u32 %v141, %v142
    %v144 = vsub.s32 4294967266, %v139
    %v145 = vadd.s32 %v144, 127
    %v146 = vshll.u32 %v145, 23
    %v147 = vor.u32 4788187, %v146
    %v148 = vand.u32 2147483647, %v147
    %v150 = vcvt.s32.f32 %v143
    %v151 = vmul.f32 %v150, %v148
    %v152 = vxor.u32 %v151, 2147483648
    %v153 = vsel %vm70, %v152, %v151
    %v154 = vsub.s32 4, %v130
    %v155 = vsel %vm70, %v154, %v130
    %v156 = vsel %vm69, %v64, %v153
    %v157 = vsel %vm69, 0, %v155
    %v158 = vcosq.f32.pop %v156
    %v159 = vsinq.f32.pop %v156
    %vm160 = vweird.f32 %v64
    %v161 = vand.u32 %v157, 3
    %vm162 = vcmp.lt.s32.totalorder %v161, 2
    %vm163 = vcmp.eq.s32.totalorder %v161, 0
    %v164 = vxor.u32 %v159, 2147483648
    %v165 = vsel %vm163, %v158, %v164
    %vm166 = vcmp.eq.s32.totalorder %v161, 2
    %v167 = vxor.u32 %v158, 2147483648
    %v168 = vsel %vm166, %v167, %v159
    %v169 = vsel %vm162, %v165, %v168
    %v170 = vsel %vm160, nan, %v169
    %v171 = vsel %vm67, %v170, %v64
    %vm172 = vcmask 261120
    %173 = vst.msk [vmem:[#allocation2] sm:$0xff] %vm172, %v171
    // Predicated region
    $region14: #{cosine_activation.1} parent=1 // pred_check
      _
    $region15: #{cosine_activation.1} parent=1 // pred_check_branch
      %175 = sbr.rel (0) target = $region17
    $region16: #{cosine_activation.1} parent=1 // pred_region
      %s177 = ssub.s32 128, 128
      %178 = vsyncadd [#allocation3], %s177
      %s180 = sshll.u32 [#allocation2], 4
      %s181 = int_to_ptr.vmem [resolvable:$true] %s180
      %183 = dma.vmem_to_hbm [thread:$0]  %s181, 128, %s3, [#allocation3]
    $region17: #{cosine_activation.1} parent=1 // pred_fallthru
      _
    // Predicated region
    $region18: #{cosine_activation.1} parent=1 // pred_check
      _
    $region19: #{cosine_activation.1} parent=1 // pred_check_branch
      %185 = sbr.rel (0) target = $region21
    $region20: #{cosine_activation.1} parent=1 // pred_region
      %186 = dma.done [#allocation3], 128
    $region21: #{cosine_activation.1} parent=1 // pred_fallthru
      _
    %187 = vsyncpa [#allocation3], 1

</llo_original>
